<compile_context>
chip_gen: v6e
topology: v6e:2x2x1
jax: 0.10.0
libtpu: 0.0.40
codegen_flags: <defaults>
</compile_context>

<pallas_src>
import math

import jax
import jax.numpy as jnp
import numpy as np
from jax.experimental import pallas as pl
from jax.experimental.pallas import tpu as pltpu  # noqa: F401  (TPU backend present)

# ---------------- config (small, consistent with the module) ----------------
CFG = dict(embed_dim=32, context_length=8)
BATCH = 2
SEQ = CFG["context_length"]        # 8
DIM = CFG["embed_dim"]             # 32
HIDDEN = 4 * DIM                   # 128

GELU_C = math.sqrt(2.0 / math.pi)  # sqrt(2/pi), same python float used in kernel & ref
GELU_CUBIC = 0.0044715             # coefficient exactly as in the module source


# ------------------------------- Pallas kernel ------------------------------
def feedforward_kernel(x_ref, w1_ref, w2_ref, b_ref, o_ref):
    """Whole-tensor FeedForward in one grid point.

    x_ref : (N, D)       with N = B*T
    w1_ref: (D, 4D)      pre-transposed (in, out)
    w2_ref: (4D, D)      pre-transposed (in, out)
    b_ref : (2, 4D)      row 0 = b1, row 1[:D] = b2 (rest zero padding)
    o_ref : (N, D)
    """
    x = x_ref[...]                                   # (N, D)
    w1 = w1_ref[...]                                 # (D, 4D)
    w2 = w2_ref[...]                                 # (4D, D)
    b = b_ref[...]                                   # (2, 4D)
    b1 = b[0:1, :]                                   # (1, 4D)
    b2 = b[1:2, :DIM]                                # (1, D)

    # first linear: hidden is lane-dense (last dim = 128)
    h = jnp.dot(x, w1, preferred_element_type=jnp.float32) + b1

    # GELU (tanh approximation, coefficients per the module source); tanh -> EUP slot
    inner = jnp.float32(GELU_C) * (h + jnp.float32(GELU_CUBIC) * h * h * h)
    g = 0.5 * h * (1.0 + jnp.tanh(inner))

    # second linear
    y = jnp.dot(g, w2, preferred_element_type=jnp.float32) + b2
    o_ref[...] = y.astype(o_ref.dtype)


def feedforward(x, params):
    """x: (B, T, D). params are in PyTorch convention:
    w1 (4D, D), b1 (4D,), w2 (D, 4D), b2 (D,)."""
    B, T, D = x.shape
    n_rows = B * T

    # fold batch into rows -> one grid point, one DMA per operand
    x2d = x.reshape(n_rows, D)

    # pre-transpose weights to (in, out) so the kernel does plain x @ W (no in-kernel .T)
    w1t = jnp.transpose(params["w1"])                # (D, 4D)
    w2t = jnp.transpose(params["w2"])                # (4D, D)

    # pack both biases into a single small operand
    b_packed = jnp.zeros((2, HIDDEN), jnp.float32)
    b_packed = b_packed.at[0, :].set(params["b1"])
    b_packed = b_packed.at[1, :D].set(params["b2"])

    out2d = pl.pallas_call(
        feedforward_kernel,
        out_shape=jax.ShapeDtypeStruct((n_rows, D), x.dtype),
    )(x2d, w1t, w2t, b_packed)
    return out2d.reshape(B, T, D)


# --------------------------- pure-JAX reference ------------------------------
def reference_ff(x, params):
    h = x @ params["w1"].T + params["b1"]
    inner = jnp.float32(GELU_C) * (h + jnp.float32(GELU_CUBIC) * h * h * h)
    g = 0.5 * h * (1.0 + jnp.tanh(inner))
    return g @ params["w2"].T + params["b2"]


# ----------------------------------- main ------------------------------------
if __name__ == "__main__":
    key = jax.random.PRNGKey(0)
    kx, k1, kb1, k2, kb2 = jax.random.split(key, 5)

    x = jax.random.normal(kx, (BATCH, SEQ, DIM), dtype=jnp.float32)

    s1 = 1.0 / math.sqrt(DIM)
    s2 = 1.0 / math.sqrt(HIDDEN)
    params = {
        "w1": jax.random.normal(k1, (HIDDEN, DIM), jnp.float32) * s1,   # (4D, D)
        "b1": jax.random.normal(kb1, (HIDDEN,), jnp.float32) * 0.01,    # (4D,)
        "w2": jax.random.normal(k2, (DIM, HIDDEN), jnp.float32) * s2,   # (D, 4D)
        "b2": jax.random.normal(kb2, (DIM,), jnp.float32) * 0.01,       # (D,)
    }

    out = jax.block_until_ready(feedforward(x, params))
    ref = jax.block_until_ready(reference_ff(x, params))
    np.testing.assert_allclose(np.asarray(out), np.asarray(ref),
                               rtol=1e-5, atol=1e-5)

    print("KERNEL_OK")
</pallas_src>

<mosaic_0001>
module attributes {stable_mosaic.version = 11 : i64} {
  func.func @feedforward_kernel(%arg0: memref<16x32xf32, #tpu.memory_space<vmem>>, %arg1: memref<32x128xf32, #tpu.memory_space<vmem>>, %arg2: memref<128x32xf32, #tpu.memory_space<vmem>>, %arg3: memref<2x128xf32, #tpu.memory_space<vmem>>, %arg4: memref<16x32xf32, #tpu.memory_space<vmem>>) attributes {dimension_semantics = [], scalar_prefetch = 0 : i64, scratch_operands = 0 : i64, tpu.core_type = #tpu.core_type<tc>} {
    %c0 = arith.constant 0 : index
    %c0_0 = arith.constant 0 : index
    %0 = vector.load %arg0[%c0, %c0_0] : memref<16x32xf32, #tpu.memory_space<vmem>>, vector<16x32xf32>
    %c0_1 = arith.constant 0 : index
    %c0_2 = arith.constant 0 : index
    %1 = vector.load %arg1[%c0_1, %c0_2] : memref<32x128xf32, #tpu.memory_space<vmem>>, vector<32x128xf32>
    %c0_3 = arith.constant 0 : index
    %c0_4 = arith.constant 0 : index
    %2 = vector.load %arg2[%c0_3, %c0_4] : memref<128x32xf32, #tpu.memory_space<vmem>>, vector<128x32xf32>
    %c0_5 = arith.constant 0 : index
    %c0_6 = arith.constant 0 : index
    %3 = vector.load %arg3[%c0_5, %c0_6] : memref<2x128xf32, #tpu.memory_space<vmem>>, vector<2x128xf32>
    %4 = vector.extract_strided_slice %3 {offsets = [0, 0], sizes = [1, 128], strides = [1, 1]} : vector<2x128xf32> to vector<1x128xf32>
    %5 = vector.extract_strided_slice %3 {offsets = [1, 0], sizes = [1, 32], strides = [1, 1]} : vector<2x128xf32> to vector<1x32xf32>
    %cst = arith.constant dense<0.000000e+00> : vector<16x128xf32>
    %6 = tpu.matmul %0, %1, %cst {dimension_numbers = #tpu.dot_dimension_numbers<[1], [0], [0], [1], [0, 0, 1, 1], [], []>} : vector<16x32xf32>, vector<32x128xf32>, vector<16x128xf32> -> vector<16x128xf32>
    %7 = vector.broadcast %4 : vector<1x128xf32> to vector<16x128xf32>
    %8 = arith.addf %6, %7 : vector<16x128xf32>
    %cst_7 = arith.constant 4.471500e-03 : f32
    %9 = vector.broadcast %cst_7 : f32 to vector<16x128xf32>
    %10 = arith.mulf %9, %8 : vector<16x128xf32>
    %11 = arith.mulf %10, %8 : vector<16x128xf32>
    %12 = arith.mulf %11, %8 : vector<16x128xf32>
    %13 = arith.addf %8, %12 : vector<16x128xf32>
    %cst_8 = arith.constant 0.797884583 : f32
    %14 = vector.broadcast %cst_8 : f32 to vector<16x128xf32>
    %15 = arith.mulf %14, %13 : vector<16x128xf32>
    %cst_9 = arith.constant 5.000000e-01 : f32
    %16 = vector.broadcast %cst_9 : f32 to vector<16x128xf32>
    %17 = arith.mulf %16, %8 : vector<16x128xf32>
    %18 = math.tanh %15 : vector<16x128xf32>
    %cst_10 = arith.constant 1.000000e+00 : f32
    %19 = vector.broadcast %cst_10 : f32 to vector<16x128xf32>
    %20 = arith.addf %19, %18 : vector<16x128xf32>
    %21 = arith.mulf %17, %20 : vector<16x128xf32>
    %cst_11 = arith.constant dense<0.000000e+00> : vector<16x32xf32>
    %22 = tpu.matmul %21, %2, %cst_11 {dimension_numbers = #tpu.dot_dimension_numbers<[1], [0], [0], [1], [0, 0, 1, 1], [], []>} : vector<16x128xf32>, vector<128x32xf32>, vector<16x32xf32> -> vector<16x32xf32>
    %23 = vector.broadcast %5 : vector<1x32xf32> to vector<16x32xf32>
    %24 = arith.addf %22, %23 : vector<16x32xf32>
    %c0_12 = arith.constant 0 : index
    %c0_13 = arith.constant 0 : index
    %25 = vector.load %arg4[%c0_12, %c0_13] : memref<16x32xf32, #tpu.memory_space<vmem>>, vector<16x32xf32>
    tpu.vector_store %arg4[%c0_12, %c0_13], %24 {strides = array<i32>} : memref<16x32xf32, #tpu.memory_space<vmem>>, vector<16x32xf32>,
    return
  }
}

</mosaic_0001>

<llo_original>
// kernel: tpu_custom_call.1
$region0: #{tpu_custom_call.1}
  #allocation0 [shape = 'u32[]', space=smem, size = 0x4, offset = 0x4, fixed_abs, tag = 'smem constant byte address 0x4 - core index']
  #allocation1 [shape = 'u32[144,128]{1,0:T(1,128)}', space=vmem, size = 0x12000, scoped, tag = 'internal scratch']
  %s0 = inlined_call_operand.vmem [shape: f32[16,32], index: 0, kind: input, shape index: {}]
  %s1 = inlined_call_operand.vmem [shape: f32[32,128], index: 1, kind: input, shape index: {}]
  %s2 = inlined_call_operand.vmem [shape: f32[128,32], index: 2, kind: input, shape index: {}]
  %s3 = inlined_call_operand.vmem [shape: f32[2,128], index: 3, kind: input, shape index: {}]
  %s4 = inlined_call_operand.hbm [shape: f32[16,32], index: 4, kind: output, shape index: {}]
  %s5 = sld [smem:[#allocation0]]
  $region26: #{tpu_custom_call.1} parent=0
    _
  %s7 = ssub.s32 1, %s5
  %s8 = scalar_select 0, %s7, %s5
  $region1: #{tpu_custom_call.1} parent=0
    #allocation2 [shape = 'u8[8192]{0}', space=vmem, size = 0x2000, scoped, tag = 'output window, operand 0, single buffered']
    #allocation3 [shape = 's32[1]{0}', space=sflag, size = 0x4, scoped, tag = 'scoped memory for tpu_custom_call.1']
    %9 = vsyncpa [#allocation3], 0
    // Predicated region
    $region2: #{tpu_custom_call.1} parent=1 // pred_check
      _
    $region3: #{tpu_custom_call.1} parent=1 // pred_check_branch
      %11 = sbr.rel (0) target = $region5
    $region4: #{tpu_custom_call.1} parent=1 // pred_region
      _
    $region5: #{tpu_custom_call.1} parent=1 // pred_fallthru
      _
    // Predicated region
    $region6: #{tpu_custom_call.1} parent=1 // pred_check
      _
    $region7: #{tpu_custom_call.1} parent=1 // pred_check_branch
      %13 = sbr.rel (0) target = $region9
    $region8: #{tpu_custom_call.1} parent=1 // pred_region
      _
    $region9: #{tpu_custom_call.1} parent=1 // pred_fallthru
      _
    // Predicated region
    $region10: #{tpu_custom_call.1} parent=1 // pred_check
      _
    $region11: #{tpu_custom_call.1} parent=1 // pred_check_branch
      %15 = sbr.rel (0) target = $region13
    $region12: #{tpu_custom_call.1} parent=1 // pred_region
      _
    $region13: #{tpu_custom_call.1} parent=1 // pred_fallthru
      _
    // Predicated region
    $region14: #{tpu_custom_call.1} parent=1 // pred_check
      _
    $region15: #{tpu_custom_call.1} parent=1 // pred_check_branch
      %17 = sbr.rel (0) target = $region17
    $region16: #{tpu_custom_call.1} parent=1 // pred_region
      _
    $region17: #{tpu_custom_call.1} parent=1 // pred_fallthru
      _
    %v18 = vld [vmem:[%s0] sm:$0xff]
    %v19 = vld [vmem:[%s0 + $0x8] sm:$0xff]
    %v20 = vld [vmem:[%s1] sm:$0xff]
    %v21 = vld [vmem:[%s1 + $0x8] sm:$0xff]
    %v22 = vld [vmem:[%s1 + $0x10] sm:$0xff]
    %v23 = vld [vmem:[%s1 + $0x18] sm:$0xff]
    %v24 = vld [vmem:[%s2] sm:$0xff]
    %v25 = vld [vmem:[%s2 + $0x8] sm:$0xff]
    %v26 = vld [vmem:[%s2 + $0x10] sm:$0xff]
    %v27 = vld [vmem:[%s2 + $0x18] sm:$0xff]
    %v28 = vld [vmem:[%s2 + $0x20] sm:$0xff]
    %v29 = vld [vmem:[%s2 + $0x28] sm:$0xff]
    %v30 = vld [vmem:[%s2 + $0x30] sm:$0xff]
    %v31 = vld [vmem:[%s2 + $0x38] sm:$0xff]
    %v32 = vld [vmem:[%s2 + $0x40] sm:$0xff]
    %v33 = vld [vmem:[%s2 + $0x48] sm:$0xff]
    %v34 = vld [vmem:[%s2 + $0x50] sm:$0xff]
    %v35 = vld [vmem:[%s2 + $0x58] sm:$0xff]
    %v36 = vld [vmem:[%s2 + $0x60] sm:$0xff]
    %v37 = vld [vmem:[%s2 + $0x68] sm:$0xff]
    %v38 = vld [vmem:[%s2 + $0x70] sm:$0xff]
    %v39 = vld [vmem:[%s2 + $0x78] sm:$0xff]
    %v40 = vld [vmem:[%s3] sm:$0x3]
    %v41 = vlaneseq
    %v42 = vshrl.u32 %v41, 7
    %v43 = vsub.s32 0, %v42
    %v44 = vrot.slane %v40, %v43
    %vm45 = vcmask 261120
    %v47 = vsel %vm45, %v18, 0
    %v50 = vsel %vm45, %v19, 0
    %52 = vmatprep.subr.mxu0 0.0
    %53 = vmatpush1.msra.mxu0 0.0
    %54 = vmatprep.subr.mxu0 0.0
    %55 = vmatpush1.msra.mxu0 0.0
    %56 = vmatprep.subr.mxu0 0.0
    %57 = vmatpush1.msra.mxu0 0.0
    %58 = vmatprep.subr.mxu0 0.0
    %59 = vmatpush1.msra.mxu0 0.0
    %60 = vmatprep.subr.mxu0 0.0
    %61 = vmatpush1.msra.mxu0 0.0
    %62 = vmatprep.subr.mxu0 0.0
    %63 = vmatpush1.msra.mxu0 0.0
    %64 = vmatprep.subr.mxu0 0.0
    %65 = vmatpush1.msra.mxu0 0.0
    %66 = vmatprep.subr.mxu0 0.0
    %67 = vmatpush1.msra.mxu0 0.0
    %68 = vmatprep.subr.mxu0 0.0
    %69 = vmatpush1.msra.mxu0 0.0
    %70 = vmatprep.subr.mxu0 0.0
    %71 = vmatpush1.msra.mxu0 0.0
    %72 = vmatprep.subr.mxu0 0.0
    %73 = vmatpush1.msra.mxu0 0.0
    %74 = vmatprep.subr.mxu0 0.0
    %75 = vmatpush1.msra.mxu0 0.0
    %76 = vmatprep.subr.mxu0 0.0
    %77 = vmatpush1.msra.mxu0 %v23
    %78 = vmatprep.subr.mxu0 0.0
    %79 = vmatpush1.msra.mxu0 %v22
    %80 = vmatprep.subr.mxu0 0.0
    %81 = vmatpush1.msra.mxu0 %v21
    %82 = vmatprep.subr.mxu0 0.0
    %83 = vmatpush1.msra.mxu0 %v20
    %84 = vmatprep.subr.mxu0 0.0
    %85 = vmatpush2.msra.mxu0 0.0
    %86 = vmatprep.subr.mxu0 0.0
    %87 = vmatpush2.msra.mxu0 0.0
    %88 = vmatprep.subr.mxu0 0.0
    %89 = vmatpush2.msra.mxu0 0.0
    %90 = vmatprep.subr.mxu0 0.0
    %91 = vmatpush2.msra.mxu0 0.0
    %92 = vmatprep.subr.mxu0 0.0
    %93 = vmatpush2.msra.mxu0 0.0
    %94 = vmatprep.subr.mxu0 0.0
    %95 = vmatpush2.msra.mxu0 0.0
    %96 = vmatprep.subr.mxu0 0.0
    %97 = vmatpush2.msra.mxu0 0.0
    %98 = vmatprep.subr.mxu0 0.0
    %99 = vmatpush2.msra.mxu0 0.0
    %100 = vmatprep.subr.mxu0 0.0
    %101 = vmatpush2.msra.mxu0 0.0
    %102 = vmatprep.subr.mxu0 0.0
    %103 = vmatpush2.msra.mxu0 0.0
    %104 = vmatprep.subr.mxu0 0.0
    %105 = vmatpush2.msra.mxu0 0.0
    %106 = vmatprep.subr.mxu0 0.0
    %107 = vmatpush2.msra.mxu0 0.0
    %108 = vmatprep.subr.mxu0 0.0
    %109 = vmatpush2.msra.mxu0 0.0
    %110 = vmatprep.subr.mxu0 0.0
    %111 = vmatpush2.msra.mxu0 0.0
    %112 = vmatprep.subr.mxu0 0.0
    %113 = vmatpush2.msra.mxu0 0.0
    %114 = vmatprep.subr.mxu0 0.0
    %115 = vmatpush2.msra.mxu0 0.0
    %116 = vmatprep.mubr.f32.mxu0 0.0
    %117 = vmatmul.mubr.f32.gmra.mxu0 %v47
    %v118 = vpop.f32.mrf.mxu0
    %v119 = vadd.f32 %v44, %v118
    %v120 = vpop.f32.mrf.mxu0
    %121 = vmatprep.mubr.f32.mxu0 0.0
    %122 = vmatmul.mubr.f32.gmra.mxu0 %v50
    %v123 = vpop.f32.mrf.mxu0
    %v124 = vadd.f32 %v44, %v123
    %v125 = vpop.f32.mrf.mxu0
    %126 = vdwg.mxu0
    %v127 = vmul.f32 %v119, 0.0044715
    %v128 = vmul.f32 %v124, 0.0044715
    %v129 = vmul.f32 %v127, %v119
    %v130 = vmul.f32 %v128, %v124
    %v131 = vmul.f32 %v129, %v119
    %v132 = vmul.f32 %v130, %v124
    %v133 = vadd.f32 %v119, %v131
    %v134 = vadd.f32 %v124, %v132
    %v135 = vmul.f32 %v133, 0.7978846
    %v136 = vmul.f32 %v134, 0.7978846
    %v137 = vmul.f32 %v119, 0.5
    %v138 = vmul.f32 %v124, 0.5
    %v139 = vtanh.pop %v135
    %v140 = vtanh.pop %v136
    %v141 = vadd.f32 %v139, 1.0
    %v142 = vadd.f32 %v140, 1.0
    %v143 = vmul.f32 %v137, %v141
    %v144 = vmul.f32 %v138, %v142
    %v145 = vlaneseq
    %v146 = vshrl.u32 %v145, 7
    %v147 = vsub.s32 1, %v146
    %v148 = vrot.slane %v40, %v147
    %149 = vmatprep.subr.mxu0 0.0
    %150 = vmatpush1.msra.mxu0 %v39
    %151 = vmatprep.subr.mxu0 0.0
    %152 = vmatpush1.msra.mxu0 %v38
    %153 = vmatprep.subr.mxu0 0.0
    %154 = vmatpush1.msra.mxu0 %v37
    %155 = vmatprep.subr.mxu0 0.0
    %156 = vmatpush1.msra.mxu0 %v36
    %157 = vmatprep.subr.mxu0 0.0
    %158 = vmatpush1.msra.mxu0 %v35
    %159 = vmatprep.subr.mxu0 0.0
    %160 = vmatpush1.msra.mxu0 %v34
    %161 = vmatprep.subr.mxu0 0.0
    %162 = vmatpush1.msra.mxu0 %v33
    %163 = vmatprep.subr.mxu0 0.0
    %164 = vmatpush1.msra.mxu0 %v32
    %165 = vmatprep.subr.mxu0 0.0
    %166 = vmatpush1.msra.mxu0 %v31
    %167 = vmatprep.subr.mxu0 0.0
    %168 = vmatpush1.msra.mxu0 %v30
    %169 = vmatprep.subr.mxu0 0.0
    %170 = vmatpush1.msra.mxu0 %v29
    %171 = vmatprep.subr.mxu0 0.0
    %172 = vmatpush1.msra.mxu0 %v28
    %173 = vmatprep.subr.mxu0 0.0
    %174 = vmatpush1.msra.mxu0 %v27
    %175 = vmatprep.subr.mxu0 0.0
    %176 = vmatpush1.msra.mxu0 %v26
    %177 = vmatprep.subr.mxu0 0.0
    %178 = vmatpush1.msra.mxu0 %v25
    %179 = vmatprep.subr.mxu0 0.0
    %180 = vmatpush1.msra.mxu0 %v24
    %181 = vmatprep.subr.mxu0 0.0
    %182 = vmatpush2.msra.mxu0 0.0
    %183 = vmatprep.subr.mxu0 0.0
    %184 = vmatpush2.msra.mxu0 0.0
    %185 = vmatprep.subr.mxu0 0.0
    %186 = vmatpush2.msra.mxu0 0.0
    %187 = vmatprep.subr.mxu0 0.0
    %188 = vmatpush2.msra.mxu0 0.0
    %189 = vmatprep.subr.mxu0 0.0
    %190 = vmatpush2.msra.mxu0 0.0
    %191 = vmatprep.subr.mxu0 0.0
    %192 = vmatpush2.msra.mxu0 0.0
    %193 = vmatprep.subr.mxu0 0.0
    %194 = vmatpush2.msra.mxu0 0.0
    %195 = vmatprep.subr.mxu0 0.0
    %196 = vmatpush2.msra.mxu0 0.0
    %197 = vmatprep.subr.mxu0 0.0
    %198 = vmatpush2.msra.mxu0 0.0
    %199 = vmatprep.subr.mxu0 0.0
    %200 = vmatpush2.msra.mxu0 0.0
    %201 = vmatprep.subr.mxu0 0.0
    %202 = vmatpush2.msra.mxu0 0.0
    %203 = vmatprep.subr.mxu0 0.0
    %204 = vmatpush2.msra.mxu0 0.0
    %205 = vmatprep.subr.mxu0 0.0
    %206 = vmatpush2.msra.mxu0 0.0
    %207 = vmatprep.subr.mxu0 0.0
    %208 = vmatpush2.msra.mxu0 0.0
    %209 = vmatprep.subr.mxu0 0.0
    %210 = vmatpush2.msra.mxu0 0.0
    %211 = vmatprep.subr.mxu0 0.0
    %212 = vmatpush2.msra.mxu0 0.0
    %213 = vmatprep.mubr.f32.mxu0 0.0
    %214 = vmatmul.mubr.f32.gmra.mxu0 %v143
    %v215 = vpop.f32.mrf.mxu0
    %v216 = vadd.f32 %v148, %v215
    %v217 = vpop.f32.mrf.mxu0
    %218 = vmatprep.mubr.f32.mxu0 0.0
    %219 = vmatmul.mubr.f32.gmra.mxu0 %v144
    %v220 = vpop.f32.mrf.mxu0
    %v221 = vadd.f32 %v148, %v220
    %v222 = vpop.f32.mrf.mxu0
    %223 = vdwg.mxu0
    %224 = vst.msk [vmem:[#allocation2] sm:$0xff] %vm45, %v216
    %225 = vst.msk [vmem:[#allocation2 + $0x8] sm:$0xff] %vm45, %v221
    // Predicated region
    $region18: #{tpu_custom_call.1} parent=1 // pred_check
      _
    $region19: #{tpu_custom_call.1} parent=1 // pred_check_branch
      %227 = sbr.rel (0) target = $region21
    $region20: #{tpu_custom_call.1} parent=1 // pred_region
      %s229 = ssub.s32 256, 256
      %230 = vsyncadd [#allocation3], %s229
      %s231 = sshll.u32 [#allocation2], 4
      %s232 = int_to_ptr.vmem [resolvable:$true] %s231
      %237 = dma.vmem_to_hbm [thread:$0]  %s232, 256, %s4, [#allocation3], 128, 128, 8
    $region21: #{tpu_custom_call.1} parent=1 // pred_fallthru
      _
    // Predicated region
    $region22: #{tpu_custom_call.1} parent=1 // pred_check
      _
    $region23: #{tpu_custom_call.1} parent=1 // pred_check_branch
      %239 = sbr.rel (0) target = $region25
    $region24: #{tpu_custom_call.1} parent=1 // pred_region
      %240 = dma.done [#allocation3], 256
    $region25: #{tpu_custom_call.1} parent=1 // pred_fallthru
      _
    %241 = vsyncpa [#allocation3], 1

</llo_original>
